<compile_context>
chip_gen: v7x
topology: tpu7x:2x2x1
jax: 0.10.0
libtpu: 0.0.40
codegen_flags: <defaults>
</compile_context>

<pallas_src>
import jax
import jax.numpy as jnp
from jax.experimental import pallas as pl
from jax.experimental.pallas import tpu as pltpu


def fcca_kernel(x_ref, w0_ref, b0_ref, w1_ref, b1_ref, w2_ref, b2_ref, out_ref):
    # x tile: (TB, in_dim) bf16; weights bf16; biases f32 (1, out).
    x = x_ref[...]

    h0 = jnp.dot(x, w0_ref[...], preferred_element_type=jnp.float32) + b0_ref[...]
    h0 = jnp.maximum(h0, 0.0)                                             # relu (f32)

    h1 = jnp.dot(h0.astype(jnp.bfloat16), w1_ref[...],
                 preferred_element_type=jnp.float32) + b1_ref[...]
    h1 = jnp.maximum(h1, 0.0)                                             # relu (f32)

    z = jnp.dot(h1.astype(jnp.bfloat16), w2_ref[...],
                preferred_element_type=jnp.float32) + b2_ref[...]         # (TB, 2)

    # softplus(z) = log(1 + exp(z)), numerically-stable form (matches F.softplus).
    sp = jnp.maximum(z, 0.0) + jnp.log1p(jnp.exp(-jnp.abs(z)))
    # Lane-dense store: (2, TB) with TB on the 128-lane axis.
    out_ref[...] = jnp.transpose(1.0 + sp)


def _round_up(n, m):
    return (n + m - 1) // m * m


def fcca_forward(x, params, block_b=2048):
    """x: [B, input_dim] float32 -> [B, 2] float32 (1 + softplus head)."""
    w0, b0, w1, b1, w2, b2 = params
    B, in_dim = x.shape

    # Batch tile: multiple of 128 (MXU M) when gridding; tiny batches just pad to 8.
    if B <= block_b:
        tb = _round_up(B, 8)
    else:
        tb = block_b                      # block_b is a multiple of 128
    b_pad = _round_up(B, tb)
    if b_pad != B:
        x = jnp.pad(x, ((0, b_pad - B), (0, 0)))

    # bf16 matmul operands; biases stay f32.
    xb = x.astype(jnp.bfloat16)
    w0b, w1b, w2b = (w.astype(jnp.bfloat16) for w in (w0, w1, w2))

    grid = (b_pad // tb,)
    resident = lambda a: pl.BlockSpec(a.shape, lambda i: (0, 0))  # DMA'd once, stays in VMEM

    out_t = pl.pallas_call(
        fcca_kernel,
        out_shape=jax.ShapeDtypeStruct((2, b_pad), jnp.float32),
        grid=grid,
        in_specs=[
            pl.BlockSpec((tb, in_dim), lambda i: (i, 0)),   # x streams over the batch grid
            resident(w0b), resident(b0),
            resident(w1b), resident(b1),
            resident(w2b), resident(b2),
        ],
        out_specs=pl.BlockSpec((2, tb), lambda i: (0, i)),  # lane-dense output tile
        compiler_params=pltpu.CompilerParams(
            dimension_semantics=("parallel",),              # megacore sharding on v7x
        ),
    )(xb, w0b, b0, w1b, b1, w2b, b2)

    return out_t.T[:B]                                      # back to [B, 2]


def init_params(key, input_dim, hidden_dims):
    """Deterministic synthetic parameters (PyTorch Linear-style uniform init)."""
    def linear(key, fan_in, fan_out):
        k_w, k_b = jax.random.split(key)
        bound = 1.0 / jnp.sqrt(float(fan_in))
        w = jax.random.uniform(k_w, (fan_in, fan_out), jnp.float32, -bound, bound)
        b = jax.random.uniform(k_b, (1, fan_out), jnp.float32, -bound, bound)
        return w, b

    k0, k1, k2 = jax.random.split(key, 3)
    w0, b0 = linear(k0, input_dim, hidden_dims)
    w1, b1 = linear(k1, hidden_dims, hidden_dims)
    w2, b2 = linear(k2, hidden_dims, 2)
    return (w0, b0, w1, b1, w2, b2)


def ref_forward(x, params):
    """Plain-JAX reference with the same bf16 matmul operands as the kernel."""
    w0, b0, w1, b1, w2, b2 = params
    bf = jnp.bfloat16
    h0 = jnp.maximum(
        jnp.dot(x.astype(bf), w0.astype(bf), preferred_element_type=jnp.float32) + b0, 0.0)
    h1 = jnp.maximum(
        jnp.dot(h0.astype(bf), w1.astype(bf), preferred_element_type=jnp.float32) + b1, 0.0)
    z = jnp.dot(h1.astype(bf), w2.astype(bf), preferred_element_type=jnp.float32) + b2
    return 1.0 + (jnp.maximum(z, 0.0) + jnp.log1p(jnp.exp(-jnp.abs(z))))


if __name__ == "__main__":
    input_dim = 16      # number of pressure sensors
    hidden_dims = 64    # 64x64 hidden layers as in the module docstring

    key = jax.random.PRNGKey(0)
    k_x, k_x2, k_p = jax.random.split(key, 3)
    params = init_params(k_p, input_dim, hidden_dims)

    # Small-batch path (single grid step, no padding beyond sublane alignment).
    x_small = jax.random.normal(k_x, (8, input_dim), jnp.float32)
    out_small = jax.block_until_ready(fcca_forward(x_small, params))
    ref_small = ref_forward(x_small, params)
    assert out_small.shape == (8, 2)
    assert jnp.allclose(out_small, ref_small, atol=2e-3, rtol=2e-3)

    # Gridded path: exercises batch padding, 128-wide tiles and the parallel grid axis.
    x_big = jax.random.normal(k_x2, (300, input_dim), jnp.float32)
    out_big = jax.block_until_ready(fcca_forward(x_big, params, block_b=128))
    ref_big = ref_forward(x_big, params)
    assert out_big.shape == (300, 2)
    assert jnp.allclose(out_big, ref_big, atol=2e-3, rtol=2e-3)

    # TODO(synk): get_predictions (Beta-distribution log_prob/entropy and action
    # rescaling) is host-side sampling/statistics glue, not part of the forward hot
    # path; not implemented in-kernel.
    print("KERNEL_OK")
</pallas_src>

<mosaic_0001>
module attributes {stable_mosaic.version = 11 : i64} {
  func.func @fcca_kernel(%arg0: i32, %arg1: memref<8x16xbf16, #tpu.memory_space<vmem>>, %arg2: memref<16x64xbf16, #tpu.memory_space<vmem>>, %arg3: memref<1x64xf32, #tpu.memory_space<vmem>>, %arg4: memref<64x64xbf16, #tpu.memory_space<vmem>>, %arg5: memref<1x64xf32, #tpu.memory_space<vmem>>, %arg6: memref<64x2xbf16, #tpu.memory_space<vmem>>, %arg7: memref<1x2xf32, #tpu.memory_space<vmem>>, %arg8: memref<2x8xf32, #tpu.memory_space<vmem>>) attributes {dimension_semantics = [#tpu.dimension_semantics<parallel>], iteration_bounds = array<i64: 1>, scalar_prefetch = 0 : i64, scratch_operands = 0 : i64, tpu.core_type = #tpu.core_type<tc>, window_params = [{transform_indices = @transform_0, window_bounds = array<i64: 8, 16>}, {pipeline_mode = #tpu.pipeline_mode<synchronous>, transform_indices = @transform_1, window_bounds = array<i64: 16, 64>}, {pipeline_mode = #tpu.pipeline_mode<synchronous>, transform_indices = @transform_2, window_bounds = array<i64: 1, 64>}, {pipeline_mode = #tpu.pipeline_mode<synchronous>, transform_indices = @transform_3, window_bounds = array<i64: 64, 64>}, {pipeline_mode = #tpu.pipeline_mode<synchronous>, transform_indices = @transform_4, window_bounds = array<i64: 1, 64>}, {pipeline_mode = #tpu.pipeline_mode<synchronous>, transform_indices = @transform_5, window_bounds = array<i64: 64, 2>}, {pipeline_mode = #tpu.pipeline_mode<synchronous>, transform_indices = @transform_6, window_bounds = array<i64: 1, 2>}, {transform_indices = @transform_7, window_bounds = array<i64: 2, 8>}]} {
    %c0 = arith.constant 0 : index
    %c0_0 = arith.constant 0 : index
    %0 = vector.load %arg1[%c0, %c0_0] : memref<8x16xbf16, #tpu.memory_space<vmem>>, vector<8x16xbf16>
    %c0_1 = arith.constant 0 : index
    %c0_2 = arith.constant 0 : index
    %1 = vector.load %arg2[%c0_1, %c0_2] : memref<16x64xbf16, #tpu.memory_space<vmem>>, vector<16x64xbf16>
    %cst = arith.constant dense<0.000000e+00> : vector<8x64xf32>
    %2 = tpu.matmul %0, %1, %cst {dimension_numbers = #tpu.dot_dimension_numbers<[1], [0], [0], [1], [0, 0, 1, 1], [], []>} : vector<8x16xbf16>, vector<16x64xbf16>, vector<8x64xf32> -> vector<8x64xf32>
    %c0_3 = arith.constant 0 : index
    %c0_4 = arith.constant 0 : index
    %3 = vector.load %arg3[%c0_3, %c0_4] : memref<1x64xf32, #tpu.memory_space<vmem>>, vector<1x64xf32>
    %4 = vector.broadcast %3 : vector<1x64xf32> to vector<8x64xf32>
    %5 = arith.addf %2, %4 : vector<8x64xf32>
    %cst_5 = arith.constant 0.000000e+00 : f32
    %6 = vector.broadcast %cst_5 : f32 to vector<8x64xf32>
    %7 = arith.maximumf %5, %6 : vector<8x64xf32>
    %8 = arith.truncf %7 : vector<8x64xf32> to vector<8x64xbf16>
    %c0_6 = arith.constant 0 : index
    %c0_7 = arith.constant 0 : index
    %9 = vector.load %arg4[%c0_6, %c0_7] : memref<64x64xbf16, #tpu.memory_space<vmem>>, vector<64x64xbf16>
    %cst_8 = arith.constant dense<0.000000e+00> : vector<8x64xf32>
    %10 = tpu.matmul %8, %9, %cst_8 {dimension_numbers = #tpu.dot_dimension_numbers<[1], [0], [0], [1], [0, 0, 1, 1], [], []>} : vector<8x64xbf16>, vector<64x64xbf16>, vector<8x64xf32> -> vector<8x64xf32>
    %c0_9 = arith.constant 0 : index
    %c0_10 = arith.constant 0 : index
    %11 = vector.load %arg5[%c0_9, %c0_10] : memref<1x64xf32, #tpu.memory_space<vmem>>, vector<1x64xf32>
    %12 = vector.broadcast %11 : vector<1x64xf32> to vector<8x64xf32>
    %13 = arith.addf %10, %12 : vector<8x64xf32>
    %cst_11 = arith.constant 0.000000e+00 : f32
    %14 = vector.broadcast %cst_11 : f32 to vector<8x64xf32>
    %15 = arith.maximumf %13, %14 : vector<8x64xf32>
    %16 = arith.truncf %15 : vector<8x64xf32> to vector<8x64xbf16>
    %c0_12 = arith.constant 0 : index
    %c0_13 = arith.constant 0 : index
    %17 = vector.load %arg6[%c0_12, %c0_13] : memref<64x2xbf16, #tpu.memory_space<vmem>>, vector<64x2xbf16>
    %cst_14 = arith.constant dense<0.000000e+00> : vector<8x2xf32>
    %18 = tpu.matmul %16, %17, %cst_14 {dimension_numbers = #tpu.dot_dimension_numbers<[1], [0], [0], [1], [0, 0, 1, 1], [], []>} : vector<8x64xbf16>, vector<64x2xbf16>, vector<8x2xf32> -> vector<8x2xf32>
    %c0_15 = arith.constant 0 : index
    %c0_16 = arith.constant 0 : index
    %19 = vector.load %arg7[%c0_15, %c0_16] : memref<1x2xf32, #tpu.memory_space<vmem>>, vector<1x2xf32>
    %20 = vector.broadcast %19 : vector<1x2xf32> to vector<8x2xf32>
    %21 = arith.addf %18, %20 : vector<8x2xf32>
    %cst_17 = arith.constant 0.000000e+00 : f32
    %22 = vector.broadcast %cst_17 : f32 to vector<8x2xf32>
    %23 = arith.maximumf %21, %22 : vector<8x2xf32>
    %24 = math.absf %21 : vector<8x2xf32>
    %cst_18 = arith.constant 0.000000e+00 : f32
    %25 = vector.broadcast %cst_18 : f32 to vector<8x2xf32>
    %26 = arith.subf %25, %24 : vector<8x2xf32>
    %27 = math.exp %26 : vector<8x2xf32>
    %28 = math.log1p %27 : vector<8x2xf32>
    %29 = arith.addf %23, %28 : vector<8x2xf32>
    %cst_19 = arith.constant 1.000000e+00 : f32
    %30 = vector.broadcast %cst_19 : f32 to vector<8x2xf32>
    %31 = arith.addf %30, %29 : vector<8x2xf32>
    %32 = tpu.transpose %31, [1, 0] : vector<8x2xf32> -> vector<2x8xf32>
    %c0_20 = arith.constant 0 : index
    %c0_21 = arith.constant 0 : index
    %33 = vector.load %arg8[%c0_20, %c0_21] : memref<2x8xf32, #tpu.memory_space<vmem>>, vector<2x8xf32>
    tpu.vector_store %arg8[%c0_20, %c0_21], %32 {strides = array<i32>} : memref<2x8xf32, #tpu.memory_space<vmem>>, vector<2x8xf32>,
    return
  }
  func.func @transform_0(%arg0: i32) -> (i32, i32) {
    %c0_i32 = arith.constant 0 : i32
    %c0_i32_0 = arith.constant 0 : i32
    return %arg0, %c0_i32 : i32, i32
  }
  func.func @transform_1(%arg0: i32) -> (i32, i32) {
    %c0_i32 = arith.constant 0 : i32
    %c0_i32_0 = arith.constant 0 : i32
    %c0_i32_1 = arith.constant 0 : i32
    return %c0_i32, %c0_i32_0 : i32, i32
  }
  func.func @transform_2(%arg0: i32) -> (i32, i32) {
    %c0_i32 = arith.constant 0 : i32
    %c0_i32_0 = arith.constant 0 : i32
    %c0_i32_1 = arith.constant 0 : i32
    return %c0_i32, %c0_i32_0 : i32, i32
  }
  func.func @transform_3(%arg0: i32) -> (i32, i32) {
    %c0_i32 = arith.constant 0 : i32
    %c0_i32_0 = arith.constant 0 : i32
    %c0_i32_1 = arith.constant 0 : i32
    return %c0_i32, %c0_i32_0 : i32, i32
  }
  func.func @transform_4(%arg0: i32) -> (i32, i32) {
    %c0_i32 = arith.constant 0 : i32
    %c0_i32_0 = arith.constant 0 : i32
    %c0_i32_1 = arith.constant 0 : i32
    return %c0_i32, %c0_i32_0 : i32, i32
  }
  func.func @transform_5(%arg0: i32) -> (i32, i32) {
    %c0_i32 = arith.constant 0 : i32
    %c0_i32_0 = arith.constant 0 : i32
    %c0_i32_1 = arith.constant 0 : i32
    return %c0_i32, %c0_i32_0 : i32, i32
  }
  func.func @transform_6(%arg0: i32) -> (i32, i32) {
    %c0_i32 = arith.constant 0 : i32
    %c0_i32_0 = arith.constant 0 : i32
    %c0_i32_1 = arith.constant 0 : i32
    return %c0_i32, %c0_i32_0 : i32, i32
  }
  func.func @transform_7(%arg0: i32) -> (i32, i32) {
    %c0_i32 = arith.constant 0 : i32
    %c0_i32_0 = arith.constant 0 : i32
    return %c0_i32, %arg0 : i32, i32
  }
}

</mosaic_0001>

<llo_original>
// kernel: tpu_custom_call.1
$region0: #{tpu_custom_call.1}
  #allocation0 [shape = 'u32[]', space=smem, size = 0x4, offset = 0x4, fixed_abs, tag = 'smem constant byte address 0x4 - core index']
  #allocation1 [shape = 'u32[144,128]{1,0:T(1,128)}', space=vmem, size = 0x12000, scoped, tag = 'internal scratch']
  %s0 = inlined_call_operand.vmem [shape: bf16[8,16], index: 0, kind: input, shape index: {}]
  %s1 = inlined_call_operand.vmem [shape: bf16[16,64], index: 1, kind: input, shape index: {}]
  %s2 = inlined_call_operand.hbm [shape: f32[1,64], index: 2, kind: input, shape index: {}]
  %s3 = inlined_call_operand.vmem [shape: bf16[64,64], index: 3, kind: input, shape index: {}]
  %s4 = inlined_call_operand.vmem [shape: f32[1,64], index: 4, kind: input, shape index: {}]
  %s5 = inlined_call_operand.vmem [shape: bf16[64,2], index: 5, kind: input, shape index: {}]
  %s6 = inlined_call_operand.vmem [shape: f32[1,2], index: 6, kind: input, shape index: {}]
  %s7 = inlined_call_operand.hbm [shape: f32[2,8], index: 7, kind: output, shape index: {}]
  %s8 = sld [smem:[#allocation0]]
  $region42: #{tpu_custom_call.1} parent=0
    _
  %s10 = ssub.s32 1, %s8
  %s11 = scalar_select 0, %s10, %s8
  $region1: #{tpu_custom_call.1} parent=0
    #allocation2 [shape = 'u8[512]{0}', space=vmem, size = 0x400, scoped, tag = 'input window, operand 2, single buffered']
    #allocation3 [shape = 's32[1]{0}', space=sflag, size = 0x4, scoped, tag = 'scoped memory for tpu_custom_call.1']
    #allocation4 [shape = 's32[1]{0}', space=sflag, size = 0x4, scoped, tag = 'scoped memory for tpu_custom_call.1']
    #allocation5 [shape = 'u8[1024]{0}', space=vmem, size = 0x400, scoped, tag = 'output window, operand 0, single buffered']
    %12 = vsyncpa [#allocation3], 0
    %13 = vsyncpa [#allocation4], 0
    // Predicated region
    $region2: #{tpu_custom_call.1} parent=1 // pred_check
      _
    $region3: #{tpu_custom_call.1} parent=1 // pred_check_branch
      %15 = sbr.rel (0) target = $region5
    $region4: #{tpu_custom_call.1} parent=1 // pred_region
      _
    $region5: #{tpu_custom_call.1} parent=1 // pred_fallthru
      _
    // Predicated region
    $region6: #{tpu_custom_call.1} parent=1 // pred_check
      _
    $region7: #{tpu_custom_call.1} parent=1 // pred_check_branch
      %17 = sbr.rel (0) target = $region9
    $region8: #{tpu_custom_call.1} parent=1 // pred_region
      _
    $region9: #{tpu_custom_call.1} parent=1 // pred_fallthru
      _
    // Predicated region
    $region10: #{tpu_custom_call.1} parent=1 // pred_check
      _
    $region11: #{tpu_custom_call.1} parent=1 // pred_check_branch
      %19 = sbr.rel (0) target = $region13
    $region12: #{tpu_custom_call.1} parent=1 // pred_region
      %s21 = ssub.s32 16, 16
      %22 = vsyncadd [#allocation3], %s21
      %s24 = sshll.u32 [#allocation2], 4
      %s25 = int_to_ptr.vmem [resolvable:$true] %s24
      %27 = dma.hbm_to_vmem [thread:$0]  %s2, 16, %s25, [#allocation3]
    $region13: #{tpu_custom_call.1} parent=1 // pred_fallthru
      _
    // Predicated region
    $region14: #{tpu_custom_call.1} parent=1 // pred_check
      _
    $region15: #{tpu_custom_call.1} parent=1 // pred_check_branch
      %29 = sbr.rel (0) target = $region17
    $region16: #{tpu_custom_call.1} parent=1 // pred_region
      _
    $region17: #{tpu_custom_call.1} parent=1 // pred_fallthru
      _
    // Predicated region
    $region18: #{tpu_custom_call.1} parent=1 // pred_check
      _
    $region19: #{tpu_custom_call.1} parent=1 // pred_check_branch
      %31 = sbr.rel (0) target = $region21
    $region20: #{tpu_custom_call.1} parent=1 // pred_region
      _
    $region21: #{tpu_custom_call.1} parent=1 // pred_fallthru
      _
    // Predicated region
    $region22: #{tpu_custom_call.1} parent=1 // pred_check
      _
    $region23: #{tpu_custom_call.1} parent=1 // pred_check_branch
      %33 = sbr.rel (0) target = $region25
    $region24: #{tpu_custom_call.1} parent=1 // pred_region
      _
    $region25: #{tpu_custom_call.1} parent=1 // pred_fallthru
      _
    // Predicated region
    $region26: #{tpu_custom_call.1} parent=1 // pred_check
      _
    $region27: #{tpu_custom_call.1} parent=1 // pred_check_branch
      %35 = sbr.rel (0) target = $region29
    $region28: #{tpu_custom_call.1} parent=1 // pred_region
      _
    $region29: #{tpu_custom_call.1} parent=1 // pred_fallthru
      _
    // Predicated region
    $region30: #{tpu_custom_call.1} parent=1 // pred_check
      _
    $region31: #{tpu_custom_call.1} parent=1 // pred_check_branch
      %37 = sbr.rel (0) target = $region33
    $region32: #{tpu_custom_call.1} parent=1 // pred_region
      %38 = dma.done [#allocation3], 16
    $region33: #{tpu_custom_call.1} parent=1 // pred_fallthru
      _
    %v40 = vld [vmem:[%s0] sm:$0xf]
    %v41 = vld [vmem:[%s1] sm:$0xf]
    %v42 = vld [vmem:[%s1 + $0x4] sm:$0xf]
    %v43 = vld [vmem:[#allocation2] sm:$0x1]
    %v45 = vlaneseq
    %v46 = vshrl.u32 %v45, 7
    %v47 = vsub.s32 0, %v46
    %v48 = vrot.slane %v43, %v47
    %v52 = vunpack.c.l.b16 %v41
    %v53 = vunpack.c.l.b16 %v42
    %v54 = vpack.c.b16 %v53, %v52
    %vm56 = vcmask 130048
    %v58 = vsel %vm56, %v40, 0
    %60 = vmatprep.subr.bf16.mxu0 0
    %61 = vmatpush1.bf16.msra.mxu0 %v54
    %62 = vmatprep.subr.bf16.mxu0 0
    %63 = vmatpush1.bf16.msra.mxu0 0
    %64 = vmatprep.subr.bf16.mxu0 0
    %65 = vmatpush1.bf16.msra.mxu0 0
    %66 = vmatprep.subr.bf16.mxu0 0
    %67 = vmatpush1.bf16.msra.mxu0 0
    %68 = vmatprep.subr.bf16.mxu0 0
    %69 = vmatpush1.bf16.msra.mxu0 0
    %70 = vmatprep.subr.bf16.mxu0 0
    %71 = vmatpush1.bf16.msra.mxu0 0
    %72 = vmatprep.subr.bf16.mxu0 0
    %73 = vmatpush1.bf16.msra.mxu0 0
    %74 = vmatprep.subr.bf16.mxu0 0
    %75 = vmatpush1.bf16.msra.mxu0 0
    %76 = vmatprep.subr.bf16.mxu0 0
    %77 = vmatpush1.bf16.msra.mxu0 0
    %78 = vmatprep.subr.bf16.mxu0 0
    %79 = vmatpush1.bf16.msra.mxu0 0
    %80 = vmatprep.subr.bf16.mxu0 0
    %81 = vmatpush1.bf16.msra.mxu0 0
    %82 = vmatprep.subr.bf16.mxu0 0
    %83 = vmatpush1.bf16.msra.mxu0 0
    %84 = vmatprep.subr.bf16.mxu0 0
    %85 = vmatpush1.bf16.msra.mxu0 0
    %86 = vmatprep.subr.bf16.mxu0 0
    %87 = vmatpush1.bf16.msra.mxu0 0
    %88 = vmatprep.subr.bf16.mxu0 0
    %89 = vmatpush1.bf16.msra.mxu0 0
    %90 = vmatprep.subr.bf16.mxu0 0
    %91 = vmatpush1.bf16.msra.mxu0 0
    %92 = vmatprep.mubr.bf16.mxu0 0
    %93 = vmatmul.mubr.bf16.gmra.mrb[0].mxu0 %v58
    %v94 = vpop.f32.mrb[0].mxu0
    %v95 = vadd.f32 %v48, %v94
    %v96 = vpop.f32.mrb[0].mxu0
    %v97 = vpop.f32.mrb[0].mxu0
    %v98 = vpop.f32.mrb[0].mxu0
    %99 = vdwg.mxu0
    %v100 = vmax.f32 %v95, 0.0
    %v101 = vpack.c.bf16 %v100, %v100
    %v102 = vld [vmem:[%s3] sm:$0xf]
    %v103 = vld [vmem:[%s3 + $0x4] sm:$0xf]
    %v104 = vld [vmem:[%s3 + $0x8] sm:$0xf]
    %v105 = vld [vmem:[%s3 + $0xc] sm:$0xf]
    %v106 = vld [vmem:[%s3 + $0x10] sm:$0xf]
    %v107 = vld [vmem:[%s3 + $0x14] sm:$0xf]
    %v108 = vld [vmem:[%s3 + $0x18] sm:$0xf]
    %v109 = vld [vmem:[%s3 + $0x1c] sm:$0xf]
    %v110 = vld [vmem:[%s4] sm:$0x1]
    %v112 = vlaneseq
    %v113 = vshrl.u32 %v112, 7
    %v114 = vsub.s32 0, %v113
    %v115 = vrot.slane %v110, %v114
    %v125 = vunpack.c.l.b16 %v102
    %v126 = vunpack.c.l.b16 %v103
    %v127 = vunpack.c.l.b16 %v104
    %v128 = vunpack.c.l.b16 %v105
    %v129 = vunpack.c.l.b16 %v106
    %v130 = vunpack.c.l.b16 %v107
    %v131 = vunpack.c.l.b16 %v108
    %v132 = vunpack.c.l.b16 %v109
    %v133 = vpack.c.b16 %v126, %v125
    %v134 = vpack.c.b16 %v128, %v127
    %v135 = vpack.c.b16 %v130, %v129
    %v136 = vpack.c.b16 %v132, %v131
    %vm141 = vcmask 523264
    %v143 = vsel %vm141, %v101, 0
    %145 = vmatprep.subr.bf16.mxu0 0
    %146 = vmatpush1.bf16.msra.mxu0 %v133
    %147 = vmatprep.subr.bf16.mxu0 0
    %148 = vmatpush1.bf16.msra.mxu0 %v134
    %149 = vmatprep.subr.bf16.mxu0 0
    %150 = vmatpush1.bf16.msra.mxu0 %v135
    %151 = vmatprep.subr.bf16.mxu0 0
    %152 = vmatpush1.bf16.msra.mxu0 %v136
    %153 = vmatprep.subr.bf16.mxu0 0
    %154 = vmatpush1.bf16.msra.mxu0 0
    %155 = vmatprep.subr.bf16.mxu0 0
    %156 = vmatpush1.bf16.msra.mxu0 0
    %157 = vmatprep.subr.bf16.mxu0 0
    %158 = vmatpush1.bf16.msra.mxu0 0
    %159 = vmatprep.subr.bf16.mxu0 0
    %160 = vmatpush1.bf16.msra.mxu0 0
    %161 = vmatprep.subr.bf16.mxu0 0
    %162 = vmatpush1.bf16.msra.mxu0 0
    %163 = vmatprep.subr.bf16.mxu0 0
    %164 = vmatpush1.bf16.msra.mxu0 0
    %165 = vmatprep.subr.bf16.mxu0 0
    %166 = vmatpush1.bf16.msra.mxu0 0
    %167 = vmatprep.subr.bf16.mxu0 0
    %168 = vmatpush1.bf16.msra.mxu0 0
    %169 = vmatprep.subr.bf16.mxu0 0
    %170 = vmatpush1.bf16.msra.mxu0 0
    %171 = vmatprep.subr.bf16.mxu0 0
    %172 = vmatpush1.bf16.msra.mxu0 0
    %173 = vmatprep.subr.bf16.mxu0 0
    %174 = vmatpush1.bf16.msra.mxu0 0
    %175 = vmatprep.subr.bf16.mxu0 0
    %176 = vmatpush1.bf16.msra.mxu0 0
    %177 = vmatprep.mubr.bf16.mxu0 0
    %178 = vmatmul.mubr.bf16.gmra.mrb[0].mxu0 %v143
    %v179 = vpop.f32.mrb[0].mxu0
    %v180 = vadd.f32 %v115, %v179
    %v181 = vpop.f32.mrb[0].mxu0
    %v182 = vpop.f32.mrb[0].mxu0
    %v183 = vpop.f32.mrb[0].mxu0
    %184 = vdwg.mxu0
    %v185 = vmax.f32 %v180, 0.0
    %v186 = vpack.c.bf16 %v185, %v185
    %v187 = vld [vmem:[%s5] sm:$0xf]
    %v188 = vld [vmem:[%s5 + $0x4] sm:$0xf]
    %v189 = vld [vmem:[%s5 + $0x8] sm:$0xf]
    %v190 = vld [vmem:[%s5 + $0xc] sm:$0xf]
    %v191 = vld [vmem:[%s5 + $0x10] sm:$0xf]
    %v192 = vld [vmem:[%s5 + $0x14] sm:$0xf]
    %v193 = vld [vmem:[%s5 + $0x18] sm:$0xf]
    %v194 = vld [vmem:[%s5 + $0x1c] sm:$0xf]
    %v195 = vld [vmem:[%s6] sm:$0x1]
    %v197 = vlaneseq
    %v198 = vshrl.u32 %v197, 7
    %v199 = vsub.s32 0, %v198
    %v200 = vrot.slane %v195, %v199
    %v210 = vunpack.c.l.b16 %v187
    %v211 = vunpack.c.l.b16 %v188
    %v212 = vunpack.c.l.b16 %v189
    %v213 = vunpack.c.l.b16 %v190
    %v214 = vunpack.c.l.b16 %v191
    %v215 = vunpack.c.l.b16 %v192
    %v216 = vunpack.c.l.b16 %v193
    %v217 = vunpack.c.l.b16 %v194
    %v218 = vpack.c.b16 %v211, %v210
    %v219 = vpack.c.b16 %v213, %v212
    %v220 = vpack.c.b16 %v215, %v214
    %v221 = vpack.c.b16 %v217, %v216
    %v227 = vsel %vm141, %v186, 0
    %229 = vmatprep.subr.bf16.mxu0 0
    %230 = vmatpush1.bf16.msra.mxu0 %v218
    %231 = vmatprep.subr.bf16.mxu0 0
    %232 = vmatpush1.bf16.msra.mxu0 %v219
    %233 = vmatprep.subr.bf16.mxu0 0
    %234 = vmatpush1.bf16.msra.mxu0 %v220
    %235 = vmatprep.subr.bf16.mxu0 0
    %236 = vmatpush1.bf16.msra.mxu0 %v221
    %237 = vmatprep.subr.bf16.mxu0 0
    %238 = vmatpush1.bf16.msra.mxu0 0
    %239 = vmatprep.subr.bf16.mxu0 0
    %240 = vmatpush1.bf16.msra.mxu0 0
    %241 = vmatprep.subr.bf16.mxu0 0
    %242 = vmatpush1.bf16.msra.mxu0 0
    %243 = vmatprep.subr.bf16.mxu0 0
    %244 = vmatpush1.bf16.msra.mxu0 0
    %245 = vmatprep.subr.bf16.mxu0 0
    %246 = vmatpush1.bf16.msra.mxu0 0
    %247 = vmatprep.subr.bf16.mxu0 0
    %248 = vmatpush1.bf16.msra.mxu0 0
    %249 = vmatprep.subr.bf16.mxu0 0
    %250 = vmatpush1.bf16.msra.mxu0 0
    %251 = vmatprep.subr.bf16.mxu0 0
    %252 = vmatpush1.bf16.msra.mxu0 0
    %253 = vmatprep.subr.bf16.mxu0 0
    %254 = vmatpush1.bf16.msra.mxu0 0
    %255 = vmatprep.subr.bf16.mxu0 0
    %256 = vmatpush1.bf16.msra.mxu0 0
    %257 = vmatprep.subr.bf16.mxu0 0
    %258 = vmatpush1.bf16.msra.mxu0 0
    %259 = vmatprep.subr.bf16.mxu0 0
    %260 = vmatpush1.bf16.msra.mxu0 0
    %261 = vmatprep.mubr.bf16.mxu0 0
    %262 = vmatmul.mubr.bf16.gmra.mrb[0].mxu0 %v227
    %v263 = vpop.f32.mrb[0].mxu0
    %v264 = vadd.f32 %v200, %v263
    %v265 = vpop.f32.mrb[0].mxu0
    %v266 = vpop.f32.mrb[0].mxu0
    %v267 = vpop.f32.mrb[0].mxu0
    %268 = vdwg.mxu0
    %v269 = vmax.f32 %v264, 0.0
    %v270 = vand.u32 2147483647, %v264
    %v271 = vsub.f32 0.0, %v270
    %v272 = vmul.f32 %v271, 1.442695
    %v273 = vpow.pop %v272
    %v274 = vadd.f32 %v273, 1.0
    %v275 = vlog2.pop %v274
    %v276 = vmul.f32 %v275, 0.6931472
    %v277 = vmul.f32 -0.5, %v273
    %v278 = vadd.f32 %v277, 1.0
    %v279 = vmul.f32 %v278, %v273
    %v280 = vand.u32 2147483647, %v273
    %vm281 = vcmp.lt.f32.partialorder %v280, 0.0004427343
    %v282 = vsel %vm281, %v279, %v276
    %v283 = vadd.f32 %v269, %v282
    %v284 = vadd.f32 %v283, 1.0
    %285 = vxpose.xlu0.b32.start [1/16] %v284, 128
    %286 = vxpose.xlu0.b32.cont [2/16] 0.0, 128
    %287 = vxpose.xlu0.b32.cont [3/16] 0.0, 128
    %288 = vxpose.xlu0.b32.cont [4/16] 0.0, 128
    %289 = vxpose.xlu0.b32.cont [5/16] 0.0, 128
    %290 = vxpose.xlu0.b32.cont [6/16] 0.0, 128
    %291 = vxpose.xlu0.b32.cont [7/16] 0.0, 128
    %292 = vxpose.xlu0.b32.cont [8/16] 0.0, 128
    %293 = vxpose.xlu0.b32.cont [9/16] 0.0, 128
    %294 = vxpose.xlu0.b32.cont [10/16] 0.0, 128
    %295 = vxpose.xlu0.b32.cont [11/16] 0.0, 128
    %296 = vxpose.xlu0.b32.cont [12/16] 0.0, 128
    %297 = vxpose.xlu0.b32.cont [13/16] 0.0, 128
    %298 = vxpose.xlu0.b32.cont [14/16] 0.0, 128
    %299 = vxpose.xlu0.b32.cont [15/16] 0.0, 128
    %300 = vxpose.xlu0.b32.end [16/16] 0.0, 128
    %v301 = vpop.trf.xlu0
    %v302 = vpop.trf.xlu0
    %v303 = vpop.trf.xlu0
    %v304 = vpop.trf.xlu0
    %v305 = vpop.trf.xlu0
    %v306 = vpop.trf.xlu0
    %v307 = vpop.trf.xlu0
    %v308 = vpop.trf.xlu0
    %v309 = vpop.trf.xlu0
    %v310 = vpop.trf.xlu0
    %v311 = vpop.trf.xlu0
    %v312 = vpop.trf.xlu0
    %v313 = vpop.trf.xlu0
    %v314 = vpop.trf.xlu0
    %v315 = vpop.trf.xlu0
    %v316 = vpop.trf.xlu0
    %vm317 = vcmask 58368
    %318 = vst.msk [vmem:[#allocation5] sm:$0x3] %vm317, %v301
    // Predicated region
    $region34: #{tpu_custom_call.1} parent=1 // pred_check
      _
    $region35: #{tpu_custom_call.1} parent=1 // pred_check_branch
      %320 = sbr.rel (0) target = $region37
    $region36: #{tpu_custom_call.1} parent=1 // pred_region
      %s322 = ssub.s32 32, 32
      %323 = vsyncadd [#allocation4], %s322
      %s325 = sshll.u32 [#allocation5], 4
      %s326 = int_to_ptr.vmem [resolvable:$true] %s325
      %328 = dma.vmem_to_hbm [thread:$0]  %s326, 32, %s7, [#allocation4]
    $region37: #{tpu_custom_call.1} parent=1 // pred_fallthru
      _
    // Predicated region
    $region38: #{tpu_custom_call.1} parent=1 // pred_check
      _
    $region39: #{tpu_custom_call.1} parent=1 // pred_check_branch
      %330 = sbr.rel (0) target = $region41
    $region40: #{tpu_custom_call.1} parent=1 // pred_region
      %331 = dma.done [#allocation4], 32
    $region41: #{tpu_custom_call.1} parent=1 // pred_fallthru
      _
    %332 = vsyncpa [#allocation3], 1
    %333 = vsyncpa [#allocation4], 1

</llo_original>
